<compile_context>
chip_gen: v7x
topology: tpu7x:2x2x1
jax: 0.10.0
libtpu: 0.0.40
codegen_flags: <defaults>
</compile_context>

<pallas_src>
import functools
import math

import jax
import jax.numpy as jnp
from jax import lax
from jax.experimental import pallas as pl
from jax.experimental.pallas import tpu as pltpu


def _round_up(n, m):
    return ((n + m - 1) // m) * m


def _tpu_vmem_capacity_bytes():
    """Physical VMEM per TensorCore; falls back to 128 MiB if unqueryable."""
    try:
        info = pltpu.get_tpu_info()
        cap = getattr(info, "vmem_capacity_bytes", None)
        if cap:
            return int(cap)
    except Exception:
        pass
    return 128 * 1024 * 1024


def _layernorm_f32(x_f32, alpha, bias, eps):
    """Custom LN: alpha*(x-mean)/(std+eps)+bias, unbiased std, two-pass stats."""
    e = x_f32.shape[-1]
    mean = jnp.sum(x_f32, axis=-1, keepdims=True) * (1.0 / e)
    d = x_f32 - mean
    var = jnp.sum(d * d, axis=-1, keepdims=True) * (1.0 / (e - 1))  # torch.std
    std = jnp.sqrt(var)
    return d * (alpha / (std + eps)) + bias


def _gelu_tanh(h):
    c = 0.7978845608028654  # sqrt(2/pi)
    return 0.5 * h * (1.0 + jnp.tanh(c * (h + 0.044715 * (h * h * h))))


# --------------------------------------------------------------------------
# K1: LayerNorm 1 + fused QKV projection (row-parallel).
# --------------------------------------------------------------------------
def _ln_qkv_kernel(x_ref, a_ref, c_ref, wqkv_ref, bqkv_ref, qkv_ref, *, eps):
    x = x_ref[...]
    xn = _layernorm_f32(x.astype(jnp.float32), a_ref[0], c_ref[0], eps)
    xn = xn.astype(x.dtype)                       # MXU operands in native dtype
    qkv = jnp.dot(xn, wqkv_ref[...], preferred_element_type=jnp.float32)
    qkv_ref[...] = (qkv + bqkv_ref[...].astype(jnp.float32)).astype(qkv_ref.dtype)


# --------------------------------------------------------------------------
# K2: attention core, one batch (all heads) per grid step.
# --------------------------------------------------------------------------
def _attention_kernel(qkv_ref, o_ref, *, num_heads, dk, scale):
    e = num_heads * dk
    outs = []
    for h in range(num_heads):                    # static unroll over heads
        q = qkv_ref[:, h * dk:(h + 1) * dk]
        k = qkv_ref[:, e + h * dk:e + (h + 1) * dk]
        v = qkv_ref[:, 2 * e + h * dk:2 * e + (h + 1) * dk]
        # contract K on its last dim -> no materialized transpose
        s = lax.dot_general(q, k, (((1,), (1,)), ((), ())),
                            preferred_element_type=jnp.float32) * scale
        m = jnp.max(s, axis=-1, keepdims=True)
        p = jnp.exp(s - m)
        inv = pl.reciprocal(jnp.sum(p, axis=-1, keepdims=True), approx=True)
        p = p * inv
        outs.append(jnp.dot(p.astype(v.dtype), v,
                            preferred_element_type=jnp.float32))
    # single lane-dense store of the whole (S, E) block
    o_ref[...] = jnp.concatenate(outs, axis=-1).astype(o_ref.dtype)


# --------------------------------------------------------------------------
# K3: O-projection + residual + LN2 + MLP (H-tiled accumulator) + residual.
# --------------------------------------------------------------------------
def _oproj_mlp_kernel(x_ref, attn_ref, wo_ref, bo_ref, a2_ref, c2_ref,
                      w1_ref, b1_ref, w2_ref, b2_ref, o_ref,
                      xn_scr, acc_scr, *, eps):
    kk = pl.program_id(1)

    @pl.when(kk == 0)
    def _init():
        a = jnp.dot(attn_ref[...], wo_ref[...],
                    preferred_element_type=jnp.float32)
        h1 = x_ref[...].astype(jnp.float32) + a + bo_ref[...].astype(jnp.float32)
        xn = _layernorm_f32(h1, a2_ref[0], c2_ref[0], eps)
        xn_scr[...] = xn.astype(xn_scr.dtype)          # native matmul dtype
        acc_scr[...] = h1 + b2_ref[...].astype(jnp.float32)  # residual + b2

    # Accumulate the MLP over this hidden-dimension chunk.
    xn = xn_scr[...]
    h = jnp.dot(xn, w1_ref[...], preferred_element_type=jnp.float32)
    h = _gelu_tanh(h + b1_ref[...].astype(jnp.float32))
    acc_scr[...] += jnp.dot(h.astype(w2_ref.dtype), w2_ref[...],
                            preferred_element_type=jnp.float32)

    @pl.when(kk == pl.num_programs(1) - 1)
    def _finalize():
        o_ref[...] = acc_scr[...].astype(o_ref.dtype)


# --------------------------------------------------------------------------
# Wrapper
# --------------------------------------------------------------------------
def encoder_block(x, params, *, num_heads, eps=1e-6,
                  row_tile=None, hidden_tile=None):
    """x: (B, S, E).  All Linear weights stored (in, out)."""
    B, S, E = x.shape
    assert E % num_heads == 0, "embed dim must be divisible by num_heads"
    dk = E // num_heads
    H = params["w1"].shape[1]
    dt = x.dtype
    M = B * S

    # ---- generation-aware tiling / VMEM limit ----------------------------
    vmem_cap = _tpu_vmem_capacity_bytes()                 # 64 MiB on v7x
    vmem_limit = int(min(0.75 * vmem_cap, 100 * 1024 * 1024))
    if row_tile is None:
        row_tile = 512 if vmem_cap >= 96 * 1024 * 1024 else 256
    row_tile = max(8, _round_up(row_tile, 8))
    tm = min(row_tile, _round_up(M, 8))
    n_row_blocks = pl.cdiv(M, tm)

    w_itemsize = params["w1"].dtype.itemsize
    if hidden_tile is None:
        hidden_tile = 2048
    budget = vmem_limit // 3                              # room for W1/W2 bufs
    t_budget = max(128, (budget // (4 * E * w_itemsize)) // 128 * 128)
    tH = int(min(max(128, _round_up(hidden_tile, 128)), t_budget,
                 _round_up(H, 128)))
    H_pad = _round_up(H, tH)

    # ---- host-side parameter plumbing (weights only; activations untouched)
    x2d = x.reshape(M, E)
    a1 = jnp.asarray(params["ln1_alpha"], jnp.float32).reshape(1)
    c1 = jnp.asarray(params["ln1_bias"], jnp.float32).reshape(1)
    a2 = jnp.asarray(params["ln2_alpha"], jnp.float32).reshape(1)
    c2 = jnp.asarray(params["ln2_bias"], jnp.float32).reshape(1)
    wqkv = jnp.concatenate([params["wq"], params["wk"], params["wv"]], axis=1)
    bqkv = jnp.concatenate(
        [params["bq"], params["bk"], params["bv"]]).reshape(1, 3 * E)

    smem_spec = pl.BlockSpec(memory_space=pltpu.MemorySpace.SMEM)

    # ---- K1: LN1 + fused QKV ---------------------------------------------
    qkv2d = pl.pallas_call(
        functools.partial(_ln_qkv_kernel, eps=eps),
        out_shape=jax.ShapeDtypeStruct((M, 3 * E), dt),
        grid=(n_row_blocks,),
        in_specs=[
            pl.BlockSpec((tm, E), lambda i: (i, 0)),      # x rows
            smem_spec, smem_spec,                         # LN1 alpha, bias
            pl.BlockSpec((E, 3 * E), lambda i: (0, 0)),   # W_qkv
            pl.BlockSpec((1, 3 * E), lambda i: (0, 0)),   # b_qkv
        ],
        out_specs=pl.BlockSpec((tm, 3 * E), lambda i: (i, 0)),
        compiler_params=pltpu.CompilerParams(
            dimension_semantics=("parallel",),
            vmem_limit_bytes=vmem_limit),
    )(x2d, a1, c1, wqkv, bqkv)

    # ---- K2: attention core (all heads per batch, no host reshapes) -------
    # TODO(synk): if S % 8 != 0 the (S, 3E) block is sublane-unaligned; pad S
    #             on the host for such shapes.
    attn2d = pl.pallas_call(
        functools.partial(_attention_kernel, num_heads=num_heads, dk=dk,
                          scale=1.0 / math.sqrt(dk)),
        out_shape=jax.ShapeDtypeStruct((M, E), dt),
        grid=(B,),
        in_specs=[pl.BlockSpec((S, 3 * E), lambda b: (b, 0))],
        out_specs=pl.BlockSpec((S, E), lambda b: (b, 0)),
        compiler_params=pltpu.CompilerParams(
            dimension_semantics=("parallel",),
            vmem_limit_bytes=vmem_limit),
    )(qkv2d)

    # ---- K3: O-proj + residual + LN2 + MLP (H-tiled) + residual -----------
    w1, b1, w2 = params["w1"], params["b1"], params["w2"]
    if H_pad != H:  # zero-padding hidden units is exact: extra W2 rows are 0
        w1 = jnp.pad(w1, ((0, 0), (0, H_pad - H)))
        b1 = jnp.pad(b1, ((0, H_pad - H),))
        w2 = jnp.pad(w2, ((0, H_pad - H), (0, 0)))

    out2d = pl.pallas_call(
        functools.partial(_oproj_mlp_kernel, eps=eps),
        out_shape=jax.ShapeDtypeStruct((M, E), dt),
        grid=(n_row_blocks, H_pad // tH),
        in_specs=[
            pl.BlockSpec((tm, E), lambda i, k: (i, 0)),   # x (residual stream)
            pl.BlockSpec((tm, E), lambda i, k: (i, 0)),   # attention output
            pl.BlockSpec((E, E), lambda i, k: (0, 0)),    # Wo
            pl.BlockSpec((1, E), lambda i, k: (0, 0)),    # bo
            smem_spec, smem_spec,                         # LN2 alpha, bias
            pl.BlockSpec((E, tH), lambda i, k: (0, k)),   # W1 hidden chunk
            pl.BlockSpec((1, tH), lambda i, k: (0, k)),   # b1 hidden chunk
            pl.BlockSpec((tH, E), lambda i, k: (k, 0)),   # W2 hidden chunk
            pl.BlockSpec((1, E), lambda i, k: (0, 0)),    # b2
        ],
        out_specs=pl.BlockSpec((tm, E), lambda i, k: (i, 0)),
        scratch_shapes=[
            pltpu.VMEM((tm, E), dt),                      # LN2(h1), native dtype
            pltpu.VMEM((tm, E), jnp.float32),             # h1 + b2 + MLP acc
        ],
        compiler_params=pltpu.CompilerParams(
            dimension_semantics=("parallel", "arbitrary"),
            vmem_limit_bytes=vmem_limit),
    )(x2d, attn2d, params["wo"], params["bo"].reshape(1, E), a2, c2,
      w1, b1.reshape(1, H_pad), w2, params["b2"].reshape(1, E))

    return out2d.reshape(B, S, E)


# --------------------------------------------------------------------------
# Pure-JAX reference (same semantics), for the in-script correctness check.
# --------------------------------------------------------------------------
def _reference(x, params, *, num_heads, eps=1e-6):
    def ln(t, alpha, bias):
        mean = jnp.mean(t, axis=-1, keepdims=True)
        std = jnp.sqrt(jnp.var(t, axis=-1, keepdims=True, ddof=1))
        return alpha * (t - mean) / (std + eps) + bias

    B, S, E = x.shape
    dk = E // num_heads

    xn = ln(x, params["ln1_alpha"], params["ln1_bias"])
    q = xn @ params["wq"] + params["bq"]
    k = xn @ params["wk"] + params["bk"]
    v = xn @ params["wv"] + params["bv"]

    def heads(t):
        return t.reshape(B, S, num_heads, dk).transpose(0, 2, 1, 3)

    qh, kh, vh = heads(q), heads(k), heads(v)
    s = jnp.einsum("bhqd,bhkd->bhqk", qh, kh) / math.sqrt(dk)
    pr = jax.nn.softmax(s, axis=-1)
    attn = jnp.einsum("bhqk,bhkd->bhqd", pr, vh)
    attn = attn.transpose(0, 2, 1, 3).reshape(B, S, E)

    h1 = x + (attn @ params["wo"] + params["bo"])
    xn2 = ln(h1, params["ln2_alpha"], params["ln2_bias"])
    h = xn2 @ params["w1"] + params["b1"]
    h = _gelu_tanh(h)
    return h1 + (h @ params["w2"] + params["b2"])


if __name__ == "__main__":
    # Small shapes consistent with the module: tokens (B, S, E), 4 heads, H=2E.
    B, S, E, H, NH = 2, 8, 32, 64, 4
    keys = jax.random.split(jax.random.PRNGKey(0), 18)

    def uni(k, shape, fan_in):
        bound = 1.0 / math.sqrt(fan_in)
        return jax.random.uniform(k, shape, minval=-bound, maxval=bound,
                                  dtype=jnp.float32)

    x = jax.random.normal(keys[0], (B, S, E), dtype=jnp.float32)
    params = {
        "ln1_alpha": 1.0 + 0.1 * jax.random.normal(keys[1], (1,), jnp.float32),
        "ln1_bias": 0.1 * jax.random.normal(keys[2], (1,), jnp.float32),
        "wq": uni(keys[3], (E, E), E), "bq": uni(keys[4], (E,), E),
        "wk": uni(keys[5], (E, E), E), "bk": uni(keys[6], (E,), E),
        "wv": uni(keys[7], (E, E), E), "bv": uni(keys[8], (E,), E),
        "wo": uni(keys[9], (E, E), E), "bo": uni(keys[10], (E,), E),
        "ln2_alpha": 1.0 + 0.1 * jax.random.normal(keys[11], (1,), jnp.float32),
        "ln2_bias": 0.1 * jax.random.normal(keys[12], (1,), jnp.float32),
        "w1": uni(keys[13], (E, H), E), "b1": uni(keys[14], (H,), E),
        "w2": uni(keys[15], (H, E), H), "b2": uni(keys[16], (E,), H),
    }

    out = encoder_block(x, params, num_heads=NH)
    out = jax.block_until_ready(out)

    ref = _reference(x, params, num_heads=NH)
    assert out.shape == (B, S, E)
    max_err = float(jnp.max(jnp.abs(out - ref)))
    # tolerance covers the approximate-reciprocal softmax normalization
    assert jnp.allclose(out, ref, atol=2e-3, rtol=2e-3), max_err

    print("KERNEL_OK")
</pallas_src>

<mosaic_0001>
module attributes {stable_mosaic.version = 11 : i64} {
  func.func @_ln_qkv_kernel(%arg0: i32, %arg1: memref<16x32xf32, #tpu.memory_space<vmem>>, %arg2: memref<1xf32, #tpu.memory_space<smem>>, %arg3: memref<1xf32, #tpu.memory_space<smem>>, %arg4: memref<32x96xf32, #tpu.memory_space<vmem>>, %arg5: memref<1x96xf32, #tpu.memory_space<vmem>>, %arg6: memref<16x96xf32, #tpu.memory_space<vmem>>) attributes {dimension_semantics = [#tpu.dimension_semantics<parallel>], iteration_bounds = array<i64: 1>, scalar_prefetch = 0 : i64, scratch_operands = 0 : i64, tpu.core_type = #tpu.core_type<tc>, window_params = [{transform_indices = @transform_0, window_bounds = array<i64: 16, 32>}, {transform_indices = @transform_1, window_bounds = array<i64: 1>}, {transform_indices = @transform_2, window_bounds = array<i64: 1>}, {pipeline_mode = #tpu.pipeline_mode<synchronous>, transform_indices = @transform_3, window_bounds = array<i64: 32, 96>}, {pipeline_mode = #tpu.pipeline_mode<synchronous>, transform_indices = @transform_4, window_bounds = array<i64: 1, 96>}, {transform_indices = @transform_5, window_bounds = array<i64: 16, 96>}]} {
    %c0 = arith.constant 0 : index
    %c0_0 = arith.constant 0 : index
    %0 = vector.load %arg1[%c0, %c0_0] : memref<16x32xf32, #tpu.memory_space<vmem>>, vector<16x32xf32>
    %c0_1 = arith.constant 0 : index
    %1 = memref.load %arg2[%c0_1] : memref<1xf32, #tpu.memory_space<smem>>
    %c0_2 = arith.constant 0 : index
    %2 = memref.load %arg3[%c0_2] : memref<1xf32, #tpu.memory_space<smem>>
    %cst = arith.constant dense<0.000000e+00> : vector<16xf32>
    %3 = vector.multi_reduction <add>, %0, %cst [1] : vector<16x32xf32> to vector<16xf32>
    %4 = vector.shape_cast %3 : vector<16xf32> to vector<16x1xf32>
    %cst_3 = arith.constant 3.125000e-02 : f32
    %5 = vector.broadcast %cst_3 : f32 to vector<16x1xf32>
    %6 = arith.mulf %4, %5 : vector<16x1xf32>
    %7 = vector.broadcast %6 : vector<16x1xf32> to vector<16x32xf32>
    %8 = arith.subf %0, %7 : vector<16x32xf32>
    %9 = arith.mulf %8, %8 : vector<16x32xf32>
    %cst_4 = arith.constant dense<0.000000e+00> : vector<16xf32>
    %10 = vector.multi_reduction <add>, %9, %cst_4 [1] : vector<16x32xf32> to vector<16xf32>
    %11 = vector.shape_cast %10 : vector<16xf32> to vector<16x1xf32>
    %cst_5 = arith.constant 0.0322580636 : f32
    %12 = vector.broadcast %cst_5 : f32 to vector<16x1xf32>
    %13 = arith.mulf %11, %12 : vector<16x1xf32>
    %14 = math.sqrt %13 : vector<16x1xf32>
    %cst_6 = arith.constant 9.99999997E-7 : f32
    %15 = vector.broadcast %cst_6 : f32 to vector<16x1xf32>
    %16 = arith.addf %14, %15 : vector<16x1xf32>
    %17 = vector.broadcast %1 : f32 to vector<16x1xf32>
    %18 = arith.divf %17, %16 : vector<16x1xf32>
    %19 = vector.broadcast %18 : vector<16x1xf32> to vector<16x32xf32>
    %20 = arith.mulf %8, %19 : vector<16x32xf32>
    %21 = vector.broadcast %2 : f32 to vector<16x32xf32>
    %22 = arith.addf %20, %21 : vector<16x32xf32>
    %c0_7 = arith.constant 0 : index
    %c0_8 = arith.constant 0 : index
    %23 = vector.load %arg4[%c0_7, %c0_8] : memref<32x96xf32, #tpu.memory_space<vmem>>, vector<32x96xf32>
    %cst_9 = arith.constant dense<0.000000e+00> : vector<16x96xf32>
    %24 = tpu.matmul %22, %23, %cst_9 {dimension_numbers = #tpu.dot_dimension_numbers<[1], [0], [0], [1], [0, 0, 1, 1], [], []>} : vector<16x32xf32>, vector<32x96xf32>, vector<16x96xf32> -> vector<16x96xf32>
    %c0_10 = arith.constant 0 : index
    %c0_11 = arith.constant 0 : index
    %25 = vector.load %arg5[%c0_10, %c0_11] : memref<1x96xf32, #tpu.memory_space<vmem>>, vector<1x96xf32>
    %26 = vector.broadcast %25 : vector<1x96xf32> to vector<16x96xf32>
    %27 = arith.addf %24, %26 : vector<16x96xf32>
    %c0_12 = arith.constant 0 : index
    %c0_13 = arith.constant 0 : index
    %28 = vector.load %arg6[%c0_12, %c0_13] : memref<16x96xf32, #tpu.memory_space<vmem>>, vector<16x96xf32>
    tpu.vector_store %arg6[%c0_12, %c0_13], %27 {strides = array<i32>} : memref<16x96xf32, #tpu.memory_space<vmem>>, vector<16x96xf32>,
    return
  }
  func.func @transform_0(%arg0: i32) -> (i32, i32) {
    %c0_i32 = arith.constant 0 : i32
    %c0_i32_0 = arith.constant 0 : i32
    return %arg0, %c0_i32 : i32, i32
  }
  func.func @transform_1(%arg0: i32) -> i32 {
    %c0_i32 = arith.constant 0 : i32
    %c0_i32_0 = arith.constant 0 : i32
    return %c0_i32 : i32
  }
  func.func @transform_2(%arg0: i32) -> i32 {
    %c0_i32 = arith.constant 0 : i32
    %c0_i32_0 = arith.constant 0 : i32
    return %c0_i32 : i32
  }
  func.func @transform_3(%arg0: i32) -> (i32, i32) {
    %c0_i32 = arith.constant 0 : i32
    %c0_i32_0 = arith.constant 0 : i32
    %c0_i32_1 = arith.constant 0 : i32
    return %c0_i32, %c0_i32_0 : i32, i32
  }
  func.func @transform_4(%arg0: i32) -> (i32, i32) {
    %c0_i32 = arith.constant 0 : i32
    %c0_i32_0 = arith.constant 0 : i32
    %c0_i32_1 = arith.constant 0 : i32
    return %c0_i32, %c0_i32_0 : i32, i32
  }
  func.func @transform_5(%arg0: i32) -> (i32, i32) {
    %c0_i32 = arith.constant 0 : i32
    %c0_i32_0 = arith.constant 0 : i32
    return %arg0, %c0_i32 : i32, i32
  }
}

</mosaic_0001>

<llo_original>
// kernel: tpu_custom_call.1
$region0: #{tpu_custom_call.1}
  #allocation0 [shape = 'u32[]', space=smem, size = 0x4, offset = 0x4, fixed_abs, tag = 'smem constant byte address 0x4 - core index']
  #allocation1 [shape = 'u32[144,128]{1,0:T(1,128)}', space=vmem, size = 0x12000, scoped, tag = 'internal scratch']
  #allocation2 [shape = 'f32[1]{0:T(128)S(6)}', space=smem, size = 0x200, scoped, tag = 'scoped memory for tpu_custom_call.1']
  #allocation3 [shape = 'f32[1]{0:T(128)S(6)}', space=smem, size = 0x200, scoped, tag = 'scoped memory for tpu_custom_call.1']
  %s0 = inlined_call_operand.hbm [shape: f32[16,32], index: 0, kind: input, shape index: {}]
  %s1 = inlined_call_operand.<no memory space> [shape: f32[1], index: 1, kind: input, shape index: {}]
  %s2 = inlined_call_operand.<no memory space> [shape: f32[1], index: 2, kind: input, shape index: {}]
  %s3 = inlined_call_operand.hbm [shape: f32[32,96], index: 3, kind: input, shape index: {}]
  %s4 = inlined_call_operand.hbm [shape: f32[1,96], index: 4, kind: input, shape index: {}]
  %s5 = inlined_call_operand.hbm [shape: f32[16,96], index: 5, kind: output, shape index: {}]
  %s6 = sld [smem:[#allocation0]]
  $region42: #{tpu_custom_call.1} parent=0
    _
  %s8 = ssub.s32 1, %s6
  %s9 = scalar_select 0, %s8, %s6
  %10 = sst [smem:[#allocation2]] %s1
  %11 = sst [smem:[#allocation3]] %s2
  $region1: #{tpu_custom_call.1} parent=0
    #allocation4 [shape = 'u8[8192]{0}', space=vmem, size = 0x2000, scoped, tag = 'input window, operand 0, single buffered']
    #allocation5 [shape = 's32[1]{0}', space=sflag, size = 0x4, scoped, tag = 'scoped memory for tpu_custom_call.1']
    #allocation6 [shape = 's32[1]{0}', space=sflag, size = 0x4, scoped, tag = 'scoped memory for tpu_custom_call.1']
    #allocation7 [shape = 'u8[16384]{0}', space=vmem, size = 0x4000, scoped, tag = 'input window, operand 3, single buffered']
    #allocation8 [shape = 's32[1]{0}', space=sflag, size = 0x4, scoped, tag = 'scoped memory for tpu_custom_call.1']
    #allocation9 [shape = 'u8[512]{0}', space=vmem, size = 0x400, scoped, tag = 'input window, operand 4, single buffered']
    #allocation10 [shape = 'u8[8192]{0}', space=vmem, size = 0x2000, scoped, tag = 'output window, operand 0, single buffered']
    %12 = vsyncpa [#allocation5], 0
    %13 = vsyncpa [#allocation8], 0
    %14 = vsyncpa [#allocation6], 0
    // Predicated region
    $region2: #{tpu_custom_call.1} parent=1 // pred_check
      _
    $region3: #{tpu_custom_call.1} parent=1 // pred_check_branch
      %16 = sbr.rel (0) target = $region5
    $region4: #{tpu_custom_call.1} parent=1 // pred_region
      %s18 = ssub.s32 256, 256
      %19 = vsyncadd [#allocation5], %s18
      %s20 = sshll.u32 [#allocation4], 4
      %s21 = int_to_ptr.vmem [resolvable:$true] %s20
      %26 = dma.hbm_to_vmem [thread:$0]  %s0, 256, %s21, [#allocation5], 128, 128, 8
    $region5: #{tpu_custom_call.1} parent=1 // pred_fallthru
      _
    // Predicated region
    $region6: #{tpu_custom_call.1} parent=1 // pred_check
      _
    $region7: #{tpu_custom_call.1} parent=1 // pred_check_branch
      %28 = sbr.rel (0) target = $region9
    $region8: #{tpu_custom_call.1} parent=1 // pred_region
      _
    $region9: #{tpu_custom_call.1} parent=1 // pred_fallthru
      _
    // Predicated region
    $region10: #{tpu_custom_call.1} parent=1 // pred_check
      _
    $region11: #{tpu_custom_call.1} parent=1 // pred_check_branch
      %30 = sbr.rel (0) target = $region13
    $region12: #{tpu_custom_call.1} parent=1 // pred_region
      _
    $region13: #{tpu_custom_call.1} parent=1 // pred_fallthru
      _
    // Predicated region
    $region14: #{tpu_custom_call.1} parent=1 // pred_check
      _
    $region15: #{tpu_custom_call.1} parent=1 // pred_check_branch
      %32 = sbr.rel (0) target = $region17
    $region16: #{tpu_custom_call.1} parent=1 // pred_region
      %s34 = ssub.s32 512, 512
      %35 = vsyncadd [#allocation8], %s34
      %s36 = sshll.u32 [#allocation7], 4
      %s37 = int_to_ptr.vmem [resolvable:$true] %s36
      %42 = dma.hbm_to_vmem [thread:$0]  %s3, 512, %s37, [#allocation8], 128, 128, 8
    $region17: #{tpu_custom_call.1} parent=1 // pred_fallthru
      _
    // Predicated region
    $region18: #{tpu_custom_call.1} parent=1 // pred_check
      _
    $region19: #{tpu_custom_call.1} parent=1 // pred_check_branch
      %44 = sbr.rel (0) target = $region21
    $region20: #{tpu_custom_call.1} parent=1 // pred_region
      %s46 = ssub.s32 16, 16
      %47 = vsyncadd [#allocation8], %s46
      %s49 = sshll.u32 [#allocation9], 4
      %s50 = int_to_ptr.vmem [resolvable:$true] %s49
      %52 = dma.hbm_to_vmem [thread:$0]  %s4, 16, %s50, [#allocation8]
    $region21: #{tpu_custom_call.1} parent=1 // pred_fallthru
      _
    // Predicated region
    $region22: #{tpu_custom_call.1} parent=1 // pred_check
      _
    $region23: #{tpu_custom_call.1} parent=1 // pred_check_branch
      %54 = sbr.rel (0) target = $region25
    $region24: #{tpu_custom_call.1} parent=1 // pred_region
      %55 = dma.done [#allocation5], 256
    $region25: #{tpu_custom_call.1} parent=1 // pred_fallthru
      _
    // Predicated region
    $region26: #{tpu_custom_call.1} parent=1 // pred_check
      _
    $region27: #{tpu_custom_call.1} parent=1 // pred_check_branch
      %57 = sbr.rel (0) target = $region29
    $region28: #{tpu_custom_call.1} parent=1 // pred_region
      %58 = dma.done [#allocation8], 512
    $region29: #{tpu_custom_call.1} parent=1 // pred_fallthru
      _
    // Predicated region
    $region30: #{tpu_custom_call.1} parent=1 // pred_check
      _
    $region31: #{tpu_custom_call.1} parent=1 // pred_check_branch
      %60 = sbr.rel (0) target = $region33
    $region32: #{tpu_custom_call.1} parent=1 // pred_region
      %61 = dma.done [#allocation8], 16
    $region33: #{tpu_custom_call.1} parent=1 // pred_fallthru
      _
    %v62 = vld [vmem:[#allocation4] sm:$0xff]
    %v63 = vld [vmem:[#allocation4 + $0x8] sm:$0xff]
    %s64 = sld [smem:[#allocation2]]
    %s65 = sld [smem:[#allocation3]]
    %vm66 = vcmask 261120
    %v67 = vsel %vm66, %v62, 0.0
    %68 = vadd.xlane.f32.xlu0 %v67
    %v69 = vpop.xlane.xlu0 %68
    %v70 = vsel %vm66, %v63, 0.0
    %71 = vadd.xlane.f32.xlu0 %v70
    %v72 = vpop.xlane.xlu0 %71
    %v73 = vmul.f32 %v69, 0.03125
    %v74 = vmul.f32 %v72, 0.03125
    %v75 = vsub.f32 %v62, %v73
    %v76 = vsub.f32 %v63, %v74
    %v77 = vmul.f32 %v75, %v75
    %v78 = vmul.f32 %v76, %v76
    %v79 = vsel %vm66, %v77, 0.0
    %80 = vadd.xlane.f32.xlu0 %v79
    %v81 = vpop.xlane.xlu0 %80
    %v82 = vsel %vm66, %v78, 0.0
    %83 = vadd.xlane.f32.xlu0 %v82
    %v84 = vpop.xlane.xlu0 %83
    %v85 = vmul.f32 %v81, 0.032258064
    %v86 = vmul.f32 %v84, 0.032258064
    %v87 = vrsqrt.pop %v85
    %v88 = vmul.f32 %v85, %v87
    %vm89 = vcmp.eq.f32.partialorder %v85, inf
    %v90 = vsel %vm89, %v85, %v88
    %vm91 = vcmp.eq.f32.partialorder %v85, 0.0
    %v92 = vand.u32 %v85, 2147483648
    %v93 = vsel %vm91, %v92, %v90
    %v94 = vrsqrt.pop %v86
    %v95 = vmul.f32 %v86, %v94
    %vm96 = vcmp.eq.f32.partialorder %v86, inf
    %v97 = vsel %vm96, %v86, %v95
    %vm98 = vcmp.eq.f32.partialorder %v86, 0.0
    %v99 = vand.u32 %v86, 2147483648
    %v100 = vsel %vm98, %v99, %v97
    %v101 = vadd.f32 %v93, 1e-06
    %v102 = vadd.f32 %v100, 1e-06
    %v103 = vstv %s64
    %v104 = vrcp.pop %v101
    %v105 = vmul.f32 %v103, %v104
    %v106 = vrcp.pop %v102
    %v107 = vmul.f32 %v103, %v106
    %v108 = vmul.f32 %v75, %v105
    %v109 = vmul.f32 %v76, %v107
    %v110 = vstv %s65
    %v111 = vadd.f32 %v108, %v110
    %v112 = vadd.f32 %v109, %v110
    %v113 = vld [vmem:[#allocation7] sm:$0xff]
    %v114 = vld [vmem:[#allocation7 + $0x8] sm:$0xff]
    %v115 = vld [vmem:[#allocation7 + $0x10] sm:$0xff]
    %v116 = vld [vmem:[#allocation7 + $0x18] sm:$0xff]
    %v117 = vld [vmem:[#allocation9] sm:$0x1]
    %v119 = vlaneseq
    %v120 = vshrl.u32 %v119, 7
    %v121 = vsub.s32 0, %v120
    %v122 = vrot.slane %v117, %v121
    %v125 = vsel %vm66, %v111, 0
    %v128 = vsel %vm66, %v112, 0
    %130 = vmatprep.subr.mxu0 0.0
    %131 = vmatpush1.msra.mxu0 %v113
    %132 = vmatprep.subr.mxu0 0.0
    %133 = vmatpush1.msra.mxu0 %v114
    %134 = vmatprep.subr.mxu0 0.0
    %135 = vmatpush1.msra.mxu0 %v115
    %136 = vmatprep.subr.mxu0 0.0
    %137 = vmatpush1.msra.mxu0 %v116
    %138 = vmatprep.subr.mxu0 0.0
    %139 = vmatpush1.msra.mxu0 0.0
    %140 = vmatprep.subr.mxu0 0.0
    %141 = vmatpush1.msra.mxu0 0.0
    %142 = vmatprep.subr.mxu0 0.0
    %143 = vmatpush1.msra.mxu0 0.0
    %144 = vmatprep.subr.mxu0 0.0
    %145 = vmatpush1.msra.mxu0 0.0
    %146 = vmatprep.subr.mxu0 0.0
    %147 = vmatpush1.msra.mxu0 0.0
    %148 = vmatprep.subr.mxu0 0.0
    %149 = vmatpush1.msra.mxu0 0.0
    %150 = vmatprep.subr.mxu0 0.0
    %151 = vmatpush1.msra.mxu0 0.0
    %152 = vmatprep.subr.mxu0 0.0
    %153 = vmatpush1.msra.mxu0 0.0
    %154 = vmatprep.subr.mxu0 0.0
    %155 = vmatpush1.msra.mxu0 0.0
    %156 = vmatprep.subr.mxu0 0.0
    %157 = vmatpush1.msra.mxu0 0.0
    %158 = vmatprep.subr.mxu0 0.0
    %159 = vmatpush1.msra.mxu0 0.0
    %160 = vmatprep.subr.mxu0 0.0
    %161 = vmatpush1.msra.mxu0 0.0
    %162 = vmatprep.subr.mxu0 0.0
    %163 = vmatpush1.msra.mxu0 0.0
    %164 = vmatprep.subr.mxu0 0.0
    %165 = vmatpush1.msra.mxu0 0.0
    %166 = vmatprep.subr.mxu0 0.0
    %167 = vmatpush1.msra.mxu0 0.0
    %168 = vmatprep.subr.mxu0 0.0
    %169 = vmatpush1.msra.mxu0 0.0
    %170 = vmatprep.subr.mxu0 0.0
    %171 = vmatpush1.msra.mxu0 0.0
    %172 = vmatprep.subr.mxu0 0.0
    %173 = vmatpush1.msra.mxu0 0.0
    %174 = vmatprep.subr.mxu0 0.0
    %175 = vmatpush1.msra.mxu0 0.0
    %176 = vmatprep.subr.mxu0 0.0
    %177 = vmatpush1.msra.mxu0 0.0
    %178 = vmatprep.subr.mxu0 0.0
    %179 = vmatpush1.msra.mxu0 0.0
    %180 = vmatprep.subr.mxu0 0.0
    %181 = vmatpush1.msra.mxu0 0.0
    %182 = vmatprep.subr.mxu0 0.0
    %183 = vmatpush1.msra.mxu0 0.0
    %184 = vmatprep.subr.mxu0 0.0
    %185 = vmatpush1.msra.mxu0 0.0
    %186 = vmatprep.subr.mxu0 0.0
    %187 = vmatpush1.msra.mxu0 0.0
    %188 = vmatprep.subr.mxu0 0.0
    %189 = vmatpush1.msra.mxu0 0.0
    %190 = vmatprep.subr.mxu0 0.0
    %191 = vmatpush1.msra.mxu0 0.0
    %192 = vmatprep.subr.mxu0 0.0
    %193 = vmatpush1.msra.mxu0 0.0
    %194 = vmatprep.mubr.f32.mxu0 0.0
    %195 = vmatmul.mubr.f32.gmra.mrb[0].mxu0 %v125
    %v196 = vpop.f32.mrb[0].mxu0
    %v197 = vadd.f32 %v122, %v196
    %v198 = vpop.f32.mrb[0].mxu0
    %199 = vmatprep.mubr.f32.mxu0 0.0
    %200 = vmatmul.mubr.f32.gmra.mrb[0].mxu0 %v128
    %v201 = vpop.f32.mrb[0].mxu0
    %v202 = vadd.f32 %v122, %v201
    %v203 = vpop.f32.mrb[0].mxu0
    %204 = vdwg.mxu0
    %vm205 = vcmask 785408
    %206 = vst.msk [vmem:[#allocation10] sm:$0xff] %vm205, %v197
    %207 = vst.msk [vmem:[#allocation10 + $0x8] sm:$0xff] %vm205, %v202
    // Predicated region
    $region34: #{tpu_custom_call.1} parent=1 // pred_check
      _
    $region35: #{tpu_custom_call.1} parent=1 // pred_check_branch
      %209 = sbr.rel (0) target = $region37
    $region36: #{tpu_custom_call.1} parent=1 // pred_region
      %s211 = ssub.s32 256, 256
      %212 = vsyncadd [#allocation6], %s211
      %s213 = sshll.u32 [#allocation10], 4
      %s214 = int_to_ptr.vmem [resolvable:$true] %s213
      %219 = dma.vmem_to_hbm [thread:$0]  %s214, 256, %s5, [#allocation6], 128, 128, 8
    $region37: #{tpu_custom_call.1} parent=1 // pred_fallthru
      _
    // Predicated region
    $region38: #{tpu_custom_call.1} parent=1 // pred_check
      _
    $region39: #{tpu_custom_call.1} parent=1 // pred_check_branch
      %221 = sbr.rel (0) target = $region41
    $region40: #{tpu_custom_call.1} parent=1 // pred_region
      %222 = dma.done [#allocation6], 256
    $region41: #{tpu_custom_call.1} parent=1 // pred_fallthru
      _
    %223 = vsyncpa [#allocation5], 1
    %224 = vsyncpa [#allocation8], 1
    %225 = vsyncpa [#allocation6], 1

</llo_original>
